<compile_context>
chip_gen: v5e
topology: v5e:2x2
jax: 0.10.0
libtpu: 0.0.40
codegen_flags: <defaults>
</compile_context>

<pallas_src>
import math

import jax
import jax.numpy as jnp
from jax.experimental import pallas as pl
from jax.experimental.pallas import tpu as pltpu


# ----------------------------------------------------------------------------- kernels
def _rezero_scalar_kernel(w_ref, x_ref, y_ref, o_ref):
    # w_ref: (1,) scalar gate in SMEM; cast once to the data dtype (keeps bf16 path).
    w = w_ref[0].astype(x_ref.dtype)
    o_ref[...] = (x_ref[...] + y_ref[...] * w).astype(o_ref.dtype)


def _rezero_vector_kernel(w_ref, x_ref, y_ref, o_ref):
    # w_ref: (1, Hf) gate row, resident in VMEM across all grid steps.
    w = w_ref[...].astype(x_ref.dtype)
    o_ref[...] = (x_ref[...] + y_ref[...] * w).astype(o_ref.dtype)


# ----------------------------------------------------------------------------- planning
def _round_up(a, b):
    return ((a + b - 1) // b) * b


def _vmem_budget():
    """(physical_vmem, scoped_limit, per-block target) sized per TPU generation."""
    try:
        info = pltpu.get_tpu_info()
        cap = int(getattr(info, "vmem_capacity_bytes", 64 << 20))
    except Exception:  # e.g. interpret mode / query unavailable -> be conservative
        cap = 64 << 20
    # v7x (64 MiB physical)  -> limit 48 MiB, ~6 MiB blocks.
    # v5e/v6e (128 MiB)      -> limit 64 MiB, ~8 MiB blocks (v5e needs the explicit
    #                           limit anyway: its scoped default is only 16 MiB).
    limit = min((cap * 3) // 4, 64 << 20)
    target_block = max(1 << 20, limit // 8)  # 2 bufs x 3 arrays = 6/8 of limit + slack
    return cap, limit, target_block


def _plan_row_tiling(Rf, Hf, itemsize, target_block_bytes):
    """Pick the row-tile so blocks fit the budget AND the step count splits evenly
    across 2 TensorCores (v7x) when there is more than ~2 MiB of work per array."""
    row_bytes = Hf * itemsize
    row_mult = 8 * max(1, 4 // itemsize)  # sublane granularity: 8(f32)/16(bf16)/32(i8)
    if Rf <= row_mult:
        return Rf  # single full-extent block (always a legal block shape)

    max_rows = max(row_mult, (target_block_bytes // row_bytes) // row_mult * row_mult)
    steps = -(-Rf // max_rows)
    if Rf * row_bytes > (2 << 20):
        steps = max(steps, 2)          # let v7x's two TCs each take a share
    if steps > 1 and steps % 2 != 0:
        steps += 1                     # even step count -> balanced core split
    tile_r = _round_up(-(-Rf // steps), row_mult)
    return min(tile_r, Rf)


# ----------------------------------------------------------------------------- wrapper
def rezero(x, y, weights, *, simple: bool, donate_x: bool = False):
    """x, y: (B, S, H). weights: shape (1,) if simple else (H,). Returns x + y*w."""
    B, S, H = x.shape
    itemsize = jnp.dtype(x.dtype).itemsize
    cap, vmem_limit, target_block = _vmem_budget()

    if simple:
        # No per-lane structure -> fully flatten to lane-dense (N/L, L), L = 512.
        N = B * S * H
        L = 512 if N >= 512 else N
        Np = _round_up(N, L)
        xf = x.reshape(-1)
        yf = y.reshape(-1)
        if Np != N:
            xf = jnp.pad(xf, (0, Np - N))
            yf = jnp.pad(yf, (0, Np - N))
        x2 = xf.reshape(Np // L, L)
        y2 = yf.reshape(Np // L, L)
        Rf, Hf = x2.shape
        # Scalar gate lives in SMEM (32-bit word); cast to x.dtype inside the kernel.
        w = weights.reshape(1).astype(jnp.float32)
        w_spec = pl.BlockSpec(memory_space=pltpu.MemorySpace.SMEM)
        kernel = _rezero_scalar_kernel
    else:
        R = B * S
        x2 = x.reshape(R, H)
        y2 = y.reshape(R, H)
        w_row = weights.reshape(1, H).astype(x.dtype)
        # Smallest k with (k*H) % 128 == 0 -> unmasked full-width stores for H=32/48/96/...
        k = 1
        if H % 128 != 0:
            k = 128 // math.gcd(H, 128)
            if k * H > 4096:          # keep the lane width sane for pathological H
                k = 1
        if k > 1:
            Rp = _round_up(R, k)
            if Rp != R:
                x2 = jnp.pad(x2, ((0, Rp - R), (0, 0)))
                y2 = jnp.pad(y2, ((0, Rp - R), (0, 0)))
            x2 = x2.reshape(Rp // k, k * H)
            y2 = y2.reshape(Rp // k, k * H)
            w_row = jnp.tile(w_row, (1, k))
        Rf, Hf = x2.shape
        w = w_row
        w_spec = pl.BlockSpec((1, Hf), lambda i: (0, 0))  # stays resident in VMEM
        kernel = _rezero_vector_kernel

    tile_r = _plan_row_tiling(Rf, Hf, itemsize, target_block)
    grid = (pl.cdiv(Rf, tile_r),)

    # Guard: for very wide Hf the minimum row tile may exceed the nominal per-block
    # budget -> declare a VMEM limit that covers the real double-buffered footprint.
    block_bytes = tile_r * Hf * itemsize
    footprint = 2 * 3 * block_bytes + _round_up(Hf * itemsize, 4096) + (2 << 20)
    vmem_limit = min(max(vmem_limit, footprint), cap)

    data_spec = pl.BlockSpec((tile_r, Hf), lambda i: (i, 0))
    out_spec = pl.BlockSpec((tile_r, Hf), lambda i: (i, 0))

    out2 = pl.pallas_call(
        kernel,
        out_shape=jax.ShapeDtypeStruct((Rf, Hf), x.dtype),
        grid_spec=pltpu.PrefetchScalarGridSpec(
            num_scalar_prefetch=0,
            grid=grid,
            in_specs=[w_spec, data_spec, data_spec],
            out_specs=out_spec,
        ),
        compiler_params=pltpu.CompilerParams(
            dimension_semantics=("parallel",),   # row tiles are independent (v7x 2 TCs)
            vmem_limit_bytes=int(vmem_limit),
        ),
        cost_estimate=pl.CostEstimate(
            flops=2 * Rf * Hf,
            transcendentals=0,
            bytes_accessed=3 * Rf * Hf * itemsize,
        ),
        # Only useful when the caller donates x (e.g. inference); off by default.
        input_output_aliases=({1: 0} if donate_x else {}),
    )(w, x2, y2)

    if simple:
        return out2.reshape(-1)[: B * S * H].reshape(B, S, H)
    if Hf != H:  # undo the lane fold (+ any row padding)
        return out2.reshape(-1, H)[: B * S].reshape(B, S, H)
    return out2.reshape(B, S, H)


# ----------------------------------------------------------------------------- tests
if __name__ == "__main__":
    key = jax.random.PRNGKey(0)
    kx, ky, kx2, ky2, kx3, ky3 = jax.random.split(key, 6)

    # --- Small shapes consistent with the module (exercises H=32 lane folding) ---
    B, S, H = 2, 8, 32
    x = jax.random.normal(kx, (B, S, H), dtype=jnp.float32)
    y = jax.random.normal(ky, (B, S, H), dtype=jnp.float32)

    fill = 0.5  # nonzero so the gate path is actually exercised
    w_simple = jnp.zeros((1,), dtype=jnp.float32) + fill          # simple=True
    w_vector = jnp.zeros((H,), dtype=jnp.float32) + fill          # simple=False

    out_s = jax.block_until_ready(rezero(x, y, w_simple, simple=True))
    ref_s = x + y * w_simple.reshape(1, 1, 1)
    assert jnp.allclose(out_s, ref_s, atol=1e-6), "simple ReZero mismatch"

    out_v = jax.block_until_ready(rezero(x, y, w_vector, simple=False))
    ref_v = x + y * w_vector.reshape(1, 1, H)
    assert jnp.allclose(out_v, ref_v, atol=1e-6), "vector ReZero mismatch"

    # --- Awkward shape: H=48 (k=8 -> 384 lanes), odd row count (padding paths) ---
    B3, S3, H3 = 2, 7, 48
    x3 = jax.random.normal(kx3, (B3, S3, H3), dtype=jnp.float32)
    y3 = jax.random.normal(ky3, (B3, S3, H3), dtype=jnp.float32)
    w3 = jnp.zeros((H3,), dtype=jnp.float32) + 0.75

    out_3v = jax.block_until_ready(rezero(x3, y3, w3, simple=False))
    ref_3v = x3 + y3 * w3.reshape(1, 1, H3)
    assert jnp.allclose(out_3v, ref_3v, atol=1e-6), "odd-shape vector ReZero mismatch"

    out_3s = jax.block_until_ready(rezero(x3, y3, w_simple, simple=True))
    ref_3s = x3 + y3 * w_simple.reshape(1, 1, 1)
    assert jnp.allclose(out_3s, ref_3s, atol=1e-6), "odd-shape simple ReZero mismatch"

    # --- Larger shape: multi-step, core-balanced pipelined grid ---
    B2, S2, H2 = 2, 1600, 512
    xb = jax.random.normal(kx2, (B2, S2, H2), dtype=jnp.float32)
    yb = jax.random.normal(ky2, (B2, S2, H2), dtype=jnp.float32)
    wb = jnp.zeros((H2,), dtype=jnp.float32) + 0.25

    out_b = jax.block_until_ready(rezero(xb, yb, wb, simple=False))
    ref_b = xb + yb * wb.reshape(1, 1, H2)
    assert jnp.allclose(out_b, ref_b, atol=1e-6), "large vector ReZero mismatch"

    out_bs = jax.block_until_ready(rezero(xb, yb, w_simple, simple=True))
    ref_bs = xb + yb * w_simple.reshape(1, 1, 1)
    assert jnp.allclose(out_bs, ref_bs, atol=1e-6), "large simple ReZero mismatch"

    print("KERNEL_OK")
</pallas_src>

<mosaic_0001>
module attributes {stable_mosaic.version = 11 : i64} {
  func.func @_rezero_scalar_kernel(%arg0: i32, %arg1: memref<1xf32, #tpu.memory_space<smem>>, %arg2: memref<1x512xf32, #tpu.memory_space<vmem>>, %arg3: memref<1x512xf32, #tpu.memory_space<vmem>>, %arg4: memref<1x512xf32, #tpu.memory_space<vmem>>) attributes {dimension_semantics = [#tpu.dimension_semantics<parallel>], iteration_bounds = array<i64: 1>, scalar_prefetch = 0 : i64, scratch_operands = 0 : i64, tpu.core_type = #tpu.core_type<tc>, window_params = [{transform_indices = @transform_0, window_bounds = array<i64: 1>}, {transform_indices = @transform_1, window_bounds = array<i64: 1, 512>}, {transform_indices = @transform_2, window_bounds = array<i64: 1, 512>}, {transform_indices = @transform_3, window_bounds = array<i64: 1, 512>}]} {
    %c0 = arith.constant 0 : index
    %0 = memref.load %arg1[%c0] : memref<1xf32, #tpu.memory_space<smem>>
    %c0_0 = arith.constant 0 : index
    %c0_1 = arith.constant 0 : index
    %1 = vector.load %arg2[%c0_0, %c0_1] : memref<1x512xf32, #tpu.memory_space<vmem>>, vector<1x512xf32>
    %c0_2 = arith.constant 0 : index
    %c0_3 = arith.constant 0 : index
    %2 = vector.load %arg3[%c0_2, %c0_3] : memref<1x512xf32, #tpu.memory_space<vmem>>, vector<1x512xf32>
    %3 = vector.broadcast %0 : f32 to vector<1x512xf32>
    %4 = arith.mulf %2, %3 : vector<1x512xf32>
    %5 = arith.addf %1, %4 : vector<1x512xf32>
    %c0_4 = arith.constant 0 : index
    %c0_5 = arith.constant 0 : index
    %6 = vector.load %arg4[%c0_4, %c0_5] : memref<1x512xf32, #tpu.memory_space<vmem>>, vector<1x512xf32>
    tpu.vector_store %arg4[%c0_4, %c0_5], %5 {strides = array<i32>} : memref<1x512xf32, #tpu.memory_space<vmem>>, vector<1x512xf32>,
    return
  }
  func.func @transform_0(%arg0: i32) -> i32 {
    %c0_i32 = arith.constant 0 : i32
    %c0_i32_0 = arith.constant 0 : i32
    return %c0_i32 : i32
  }
  func.func @transform_1(%arg0: i32) -> (i32, i32) {
    %c0_i32 = arith.constant 0 : i32
    %c0_i32_0 = arith.constant 0 : i32
    return %arg0, %c0_i32 : i32, i32
  }
  func.func @transform_2(%arg0: i32) -> (i32, i32) {
    %c0_i32 = arith.constant 0 : i32
    %c0_i32_0 = arith.constant 0 : i32
    return %arg0, %c0_i32 : i32, i32
  }
  func.func @transform_3(%arg0: i32) -> (i32, i32) {
    %c0_i32 = arith.constant 0 : i32
    %c0_i32_0 = arith.constant 0 : i32
    return %arg0, %c0_i32 : i32, i32
  }
}

</mosaic_0001>

<llo_original>
// kernel: tpu_custom_call.1
$region0: #{tpu_custom_call.1}
  #allocation0 [shape = 'u32[]', space=smem, size = 0x4, offset = 0x4, fixed_abs, tag = 'smem constant byte address 0x4 - core index']
  #allocation1 [shape = 'u32[72,128]{1,0:T(1,128)}', space=vmem, size = 0x9000, scoped, tag = 'internal scratch']
  #allocation2 [shape = 'f32[1]{0:T(128)S(6)}', space=smem, size = 0x200, scoped, tag = 'scoped memory for tpu_custom_call.1']
  %s0 = inlined_call_operand.<no memory space> [shape: f32[1], index: 0, kind: input, shape index: {}]
  %s1 = inlined_call_operand.hbm [shape: f32[1,512], index: 1, kind: input, shape index: {}]
  %s2 = inlined_call_operand.hbm [shape: f32[1,512], index: 2, kind: input, shape index: {}]
  %s3 = inlined_call_operand.hbm [shape: f32[1,512], index: 3, kind: output, shape index: {}]
  %s4 = sld [smem:[#allocation0]]
  $region30: #{tpu_custom_call.1} parent=0
    _
  %s6 = ssub.s32 1, %s4
  %s7 = scalar_select 0, %s6, %s4
  %8 = sst [smem:[#allocation2]] %s0
  $region1: #{tpu_custom_call.1} parent=0
    #allocation3 [shape = 'u8[2048]{0}', space=vmem, size = 0x800, scoped, tag = 'input window, operand 1, single buffered']
    #allocation4 [shape = 's32[1]{0}', space=sflag, size = 0x4, scoped, tag = 'scoped memory for tpu_custom_call.1']
    #allocation5 [shape = 's32[1]{0}', space=sflag, size = 0x4, scoped, tag = 'scoped memory for tpu_custom_call.1']
    #allocation6 [shape = 'u8[2048]{0}', space=vmem, size = 0x800, scoped, tag = 'input window, operand 2, single buffered']
    #allocation7 [shape = 's32[1]{0}', space=sflag, size = 0x4, scoped, tag = 'scoped memory for tpu_custom_call.1']
    #allocation8 [shape = 'u8[2048]{0}', space=vmem, size = 0x800, scoped, tag = 'output window, operand 0, single buffered']
    %9 = vsyncpa [#allocation4], 0
    %10 = vsyncpa [#allocation7], 0
    %11 = vsyncpa [#allocation5], 0
    // Predicated region
    $region2: #{tpu_custom_call.1} parent=1 // pred_check
      _
    $region3: #{tpu_custom_call.1} parent=1 // pred_check_branch
      %13 = sbr.rel (0) target = $region5
    $region4: #{tpu_custom_call.1} parent=1 // pred_region
      _
    $region5: #{tpu_custom_call.1} parent=1 // pred_fallthru
      _
    // Predicated region
    $region6: #{tpu_custom_call.1} parent=1 // pred_check
      _
    $region7: #{tpu_custom_call.1} parent=1 // pred_check_branch
      %15 = sbr.rel (0) target = $region9
    $region8: #{tpu_custom_call.1} parent=1 // pred_region
      %17 = vsyncadd [#allocation4], 0
      %s19 = sshll.u32 %s1, 4
      %s20 = int_to_ptr.hbm [resolvable:$true] %s19
      %s21 = sshll.u32 [#allocation3], 4
      %s22 = int_to_ptr.vmem [resolvable:$true] %s21
      %24 = dma.hbm_to_vmem [thread:$0]  %s20, 64, %s22, [#allocation4]
    $region9: #{tpu_custom_call.1} parent=1 // pred_fallthru
      _
    // Predicated region
    $region10: #{tpu_custom_call.1} parent=1 // pred_check
      _
    $region11: #{tpu_custom_call.1} parent=1 // pred_check_branch
      %26 = sbr.rel (0) target = $region13
    $region12: #{tpu_custom_call.1} parent=1 // pred_region
      %28 = vsyncadd [#allocation7], 0
      %s30 = sshll.u32 %s2, 4
      %s31 = int_to_ptr.hbm [resolvable:$true] %s30
      %s32 = sshll.u32 [#allocation6], 4
      %s33 = int_to_ptr.vmem [resolvable:$true] %s32
      %35 = dma.hbm_to_vmem [thread:$0]  %s31, 64, %s33, [#allocation7]
    $region13: #{tpu_custom_call.1} parent=1 // pred_fallthru
      _
    // Predicated region
    $region14: #{tpu_custom_call.1} parent=1 // pred_check
      _
    $region15: #{tpu_custom_call.1} parent=1 // pred_check_branch
      %37 = sbr.rel (0) target = $region17
    $region16: #{tpu_custom_call.1} parent=1 // pred_region
      %39 = dma.done [#allocation4], 64
    $region17: #{tpu_custom_call.1} parent=1 // pred_fallthru
      _
    // Predicated region
    $region18: #{tpu_custom_call.1} parent=1 // pred_check
      _
    $region19: #{tpu_custom_call.1} parent=1 // pred_check_branch
      %41 = sbr.rel (0) target = $region21
    $region20: #{tpu_custom_call.1} parent=1 // pred_region
      %43 = dma.done [#allocation7], 64
    $region21: #{tpu_custom_call.1} parent=1 // pred_fallthru
      _
    %s44 = sld [smem:[#allocation2]]
    %v45 = vld [vmem:[#allocation3] sm:$0xf]
    %v46 = vld [vmem:[#allocation6] sm:$0xf]
    %v47 = vstv %s44
    %v48 = vmul.f32 %v46, %v47
    %v49 = vadd.f32 %v45, %v48
    %v50 = vlaneseq
    %vm51 = vcmp.ge.s32.totalorder %v50, 0
    %vm52 = vcmp.lt.s32.totalorder %v50, 512
    %vm53 = vmand %vm51, %vm52
    %54 = vst.msk [vmem:[#allocation8] sm:$0xf] %vm53, %v49
    // Predicated region
    $region22: #{tpu_custom_call.1} parent=1 // pred_check
      _
    $region23: #{tpu_custom_call.1} parent=1 // pred_check_branch
      %56 = sbr.rel (0) target = $region25
    $region24: #{tpu_custom_call.1} parent=1 // pred_region
      %58 = vsyncadd [#allocation5], 0
      %s60 = sshll.u32 [#allocation8], 4
      %s61 = int_to_ptr.vmem [resolvable:$true] %s60
      %s62 = sshll.u32 %s3, 4
      %s63 = int_to_ptr.hbm [resolvable:$true] %s62
      %65 = dma.vmem_to_hbm [thread:$0]  %s61, 64, %s63, [#allocation5]
    $region25: #{tpu_custom_call.1} parent=1 // pred_fallthru
      _
    // Predicated region
    $region26: #{tpu_custom_call.1} parent=1 // pred_check
      _
    $region27: #{tpu_custom_call.1} parent=1 // pred_check_branch
      %67 = sbr.rel (0) target = $region29
    $region28: #{tpu_custom_call.1} parent=1 // pred_region
      %69 = dma.done [#allocation5], 64
    $region29: #{tpu_custom_call.1} parent=1 // pred_fallthru
      _
    %70 = vsyncpa [#allocation4], 1
    %71 = vsyncpa [#allocation7], 1
    %72 = vsyncpa [#allocation5], 1

</llo_original>
